<compile_context>
chip_gen: v7x
topology: tpu7x:2x2x1
jax: 0.10.0
libtpu: 0.0.40
codegen_flags: <defaults>
</compile_context>

<pallas_src>
import jax
import jax.numpy as jnp
from jax.experimental import pallas as pl
from jax.experimental.pallas import tpu as pltpu


def _pick_rows(R, bytes_per_row, budget_bytes):
    """Largest row tile that (a) divides R, (b) is a multiple of 8 or equals R,
    (c) keeps a single block under budget_bytes."""
    max_rows = max(1, budget_bytes // bytes_per_row)
    if R <= max_rows:
        return R                       # full extent: always (8,128)-legal
    t = (max_rows // 8) * 8
    while t >= 8:
        if R % t == 0:
            return t                   # multiple-of-8 divisor: unmasked tiles
        t -= 8
    # TODO(synk): awkward R with no multiple-of-8 divisor under budget; fall back
    # to full rows (legal, may exceed the block budget).  A masked cdiv grid would
    # be the fully general fix.
    return R


def _conv1x1_sigmoid_psum_kernel(x_ref, w_ref, b_ref, y_ref, p_ref):
    """x_ref: (C, TR, 128) VMEM; w_ref: (C,) SMEM; b_ref: (1,) SMEM;
    y_ref: (TR, 128) VMEM; p_ref: (1, 128) per-step lane-wise partial sum."""
    C = x_ref.shape[0]

    # 1x1 conv == per-pixel channel contraction; C is tiny, do it on the VPU.
    z = x_ref[0] * w_ref[0]
    for c in range(1, C):                 # static unroll over channels
        z = z + x_ref[c] * w_ref[c]
    z = z + b_ref[0]

    # sigmoid: exp on the EUP; exact reciprocal (refinement ops are free filler
    # on an HBM-bound kernel and keep the 1e-5 tolerance).
    y = pl.reciprocal(1.0 + jnp.exp(-z), approx=False)
    y_ref[...] = y

    # Per-step partial sum: reduce over sublanes only (XLU); lane + cross-block
    # reduction happens in the wrapper as an XLA tree reduce.
    p_ref[...] = jnp.sum(y, axis=0, keepdims=True)


def _scale_kernel(y_ref, m_ref, o_ref):
    """o = y * (H*W*0.5 / xsum); the scalar multiplier is precomputed in the wrapper."""
    o_ref[...] = y_ref[...] * m_ref[0]


def attention_mask_forward(x_nchw, weight, bias):
    """x_nchw: (N, C, H, W) f32; weight: (1, C, 1, 1); bias: (1,). Returns (N, 1, H, W)."""
    N, C, H, W = x_nchw.shape
    HW = H * W
    assert HW % 128 == 0, "H*W must be a multiple of 128 (lane width)"
    R = HW // 128                                    # 128-lane rows per image
    f32 = 4

    # ---- Pass 1 tiling: ~4 MiB x-blocks, TR multiple of 8 (or full R). ----
    TR = _pick_rows(R, bytes_per_row=C * 128 * f32, budget_bytes=4 << 20)
    G = R // TR
    grid1 = (N, G)

    # Free reshapes (row-major): NCHW stays NCHW, pixels become (R, 128) slabs.
    x4 = x_nchw.reshape(N, C, R, 128).astype(jnp.float32)
    w = weight.reshape(C).astype(jnp.float32)
    b = bias.reshape(1).astype(jnp.float32)

    vmem1 = 2 * (C * TR * 128 * f32) + 2 * (TR * 128 * f32) + 2 * (128 * f32) + (4 << 20)
    vmem1 = min(vmem1, 64 << 20)

    cost1 = pl.CostEstimate(
        flops=(2 * C + 4) * N * HW,
        transcendentals=N * HW,
        bytes_accessed=(C + 1) * N * HW * f32 + N * G * 128 * f32,
    )

    # Pass 1: 1x1 conv + sigmoid + per-step partial sums.  No revisited blocks ->
    # both grid axes "parallel" (megacore-shardable on v7x).
    y, psum = pl.pallas_call(
        _conv1x1_sigmoid_psum_kernel,
        out_shape=(
            jax.ShapeDtypeStruct((N, R, 128), jnp.float32),
            jax.ShapeDtypeStruct((N, G, 1, 128), jnp.float32),
        ),
        grid_spec=pltpu.PrefetchScalarGridSpec(
            num_scalar_prefetch=0,
            grid=grid1,
            in_specs=[
                # None => size-1 squeezed batch dim; kernel sees (C, TR, 128).
                pl.BlockSpec((None, C, TR, 128), lambda n, j: (n, 0, j, 0)),
                pl.BlockSpec(memory_space=pltpu.SMEM),   # conv weights (C,)
                pl.BlockSpec(memory_space=pltpu.SMEM),   # conv bias (1,)
            ],
            out_specs=(
                pl.BlockSpec((None, TR, 128), lambda n, j: (n, j, 0)),
                pl.BlockSpec((None, None, 1, 128), lambda n, j: (n, j, 0, 0)),
            ),
        ),
        compiler_params=pltpu.CompilerParams(
            dimension_semantics=("parallel", "parallel"),
            vmem_limit_bytes=int(vmem1)),
        cost_estimate=cost1,
    )(x4, w, b)

    # Global sum (sigmoid > 0 so |y| == y) as an XLA tree reduction; then the
    # single scalar multiplier (tiny XLA scalar ops under jit).
    xsum = jnp.sum(psum)
    mult = (jnp.float32(H * W * 0.5) / xsum).reshape(1)

    # ---- Pass 2 tiling: only one streamed array -> its own, larger tile. ----
    TR2 = _pick_rows(R, bytes_per_row=128 * f32, budget_bytes=4 << 20)
    grid2 = (N, R // TR2)
    vmem2 = 4 * (TR2 * 128 * f32) + (2 << 20)
    vmem2 = min(vmem2, 64 << 20)

    cost2 = pl.CostEstimate(
        flops=N * HW,
        transcendentals=0,
        bytes_accessed=2 * N * HW * f32,
    )

    # Pass 2: in-place scalar scaling of y; fully parallel grid (megacore-friendly).
    out = pl.pallas_call(
        _scale_kernel,
        out_shape=jax.ShapeDtypeStruct((N, R, 128), jnp.float32),
        grid_spec=pltpu.PrefetchScalarGridSpec(
            num_scalar_prefetch=0,
            grid=grid2,
            in_specs=[
                pl.BlockSpec((None, TR2, 128), lambda n, j: (n, j, 0)),
                pl.BlockSpec(memory_space=pltpu.SMEM),   # scale scalar (1,)
            ],
            out_specs=pl.BlockSpec((None, TR2, 128), lambda n, j: (n, j, 0)),
        ),
        compiler_params=pltpu.CompilerParams(
            dimension_semantics=("parallel", "parallel"),
            vmem_limit_bytes=int(vmem2)),
        cost_estimate=cost2,
        input_output_aliases={0: 0},     # overwrite y in place, no extra HBM alloc
    )(y, mult)

    # (N, R, 128) -> (N, 1, H, W): pure reshape, no transpose needed.
    return out.reshape(N, 1, H, W)


def _reference(x, weight, bias):
    """Pure-JAX reference of the PyTorch forward."""
    w = weight.reshape(1, -1)                                     # (1, C)
    y = jnp.einsum("nchw,oc->nohw", x, w) + bias.reshape(1, 1, 1, 1)
    y = jax.nn.sigmoid(y)
    xsum = jnp.sum(jnp.abs(y.reshape(-1)))
    return y / xsum * x.shape[2] * x.shape[3] * 0.5


if __name__ == "__main__":
    # Small shapes consistent with the module: in_channel=4, batch=2, 16x16 spatial.
    N, C, H, W = 2, 4, 16, 16

    key = jax.random.PRNGKey(0)
    kx, kw, kb = jax.random.split(key, 3)
    x = jax.random.normal(kx, (N, C, H, W), jnp.float32)
    weight = jax.random.normal(kw, (1, C, 1, 1), jnp.float32) * 0.1   # Conv2d(C,1,1) weight
    bias = jax.random.normal(kb, (1,), jnp.float32) * 0.1             # Conv2d bias

    fwd = jax.jit(attention_mask_forward)
    out = jax.block_until_ready(fwd(x, weight, bias))

    ref = _reference(x, weight, bias)
    assert out.shape == (N, 1, H, W), out.shape
    assert jnp.allclose(out, ref, atol=1e-5, rtol=1e-5), float(jnp.max(jnp.abs(out - ref)))

    print("KERNEL_OK")
</pallas_src>

<mosaic_0001>
module attributes {stable_mosaic.version = 11 : i64} {
  func.func @_scale_kernel(%arg0: i32, %arg1: i32, %arg2: memref<1x2x128xf32, #tpu.memory_space<vmem>>, %arg3: memref<1xf32, #tpu.memory_space<smem>>, %arg4: memref<1x2x128xf32, #tpu.memory_space<vmem>>) attributes {dimension_semantics = [#tpu.dimension_semantics<parallel>, #tpu.dimension_semantics<parallel>], iteration_bounds = array<i64: 2, 1>, scalar_prefetch = 0 : i64, scratch_operands = 0 : i64, tpu.core_type = #tpu.core_type<tc>, window_params = [{transform_indices = @transform_0, window_bounds = array<i64: 1, 2, 128>}, {transform_indices = @transform_1, window_bounds = array<i64: 1>}, {transform_indices = @transform_2, window_bounds = array<i64: 1, 2, 128>}]} {
    %c0 = arith.constant 0 : index
    %c0_0 = arith.constant 0 : index
    %c0_1 = arith.constant 0 : index
    %0 = vector.load %arg2[%c0, %c0_0, %c0_1] : memref<1x2x128xf32, #tpu.memory_space<vmem>>, vector<1x2x128xf32>
    %1 = vector.shape_cast %0 : vector<1x2x128xf32> to vector<2x128xf32>
    %c0_2 = arith.constant 0 : index
    %2 = memref.load %arg3[%c0_2] : memref<1xf32, #tpu.memory_space<smem>>
    %3 = vector.broadcast %2 : f32 to vector<2x128xf32>
    %4 = arith.mulf %1, %3 : vector<2x128xf32>
    %c0_3 = arith.constant 0 : index
    %c0_4 = arith.constant 0 : index
    %c0_5 = arith.constant 0 : index
    %5 = vector.load %arg4[%c0_3, %c0_4, %c0_5] : memref<1x2x128xf32, #tpu.memory_space<vmem>>, vector<1x2x128xf32>
    %6 = vector.shape_cast %5 : vector<1x2x128xf32> to vector<2x128xf32>
    %7 = vector.shape_cast %4 : vector<2x128xf32> to vector<1x2x128xf32>
    tpu.vector_store %arg4[%c0_3, %c0_4, %c0_5], %7 {strides = array<i32>} : memref<1x2x128xf32, #tpu.memory_space<vmem>>, vector<1x2x128xf32>,
    return
  }
  func.func @transform_0(%arg0: i32, %arg1: i32) -> (i32, i32, i32) {
    %c0_i32 = arith.constant 0 : i32
    %c0_i32_0 = arith.constant 0 : i32
    return %arg0, %arg1, %c0_i32 : i32, i32, i32
  }
  func.func @transform_1(%arg0: i32, %arg1: i32) -> i32 {
    %c0_i32 = arith.constant 0 : i32
    %c0_i32_0 = arith.constant 0 : i32
    return %c0_i32 : i32
  }
  func.func @transform_2(%arg0: i32, %arg1: i32) -> (i32, i32, i32) {
    %c0_i32 = arith.constant 0 : i32
    %c0_i32_0 = arith.constant 0 : i32
    return %arg0, %arg1, %c0_i32 : i32, i32, i32
  }
}

module attributes {stable_mosaic.version = 11 : i64} {
  func.func @_conv1x1_sigmoid_psum_kernel(%arg0: i32, %arg1: i32, %arg2: memref<1x4x2x128xf32, #tpu.memory_space<vmem>>, %arg3: memref<4xf32, #tpu.memory_space<smem>>, %arg4: memref<1xf32, #tpu.memory_space<smem>>, %arg5: memref<1x2x128xf32, #tpu.memory_space<vmem>>, %arg6: memref<1x1x1x128xf32, #tpu.memory_space<vmem>>) attributes {dimension_semantics = [#tpu.dimension_semantics<parallel>, #tpu.dimension_semantics<parallel>], iteration_bounds = array<i64: 2, 1>, scalar_prefetch = 0 : i64, scratch_operands = 0 : i64, tpu.core_type = #tpu.core_type<tc>, window_params = [{transform_indices = @transform_0, window_bounds = array<i64: 1, 4, 2, 128>}, {transform_indices = @transform_1, window_bounds = array<i64: 4>}, {transform_indices = @transform_2, window_bounds = array<i64: 1>}, {transform_indices = @transform_3, window_bounds = array<i64: 1, 2, 128>}, {transform_indices = @transform_4, window_bounds = array<i64: 1, 1, 1, 128>}]} {
    %c0 = arith.constant 0 : index
    %c0_0 = arith.constant 0 : index
    %c0_1 = arith.constant 0 : index
    %c0_2 = arith.constant 0 : index
    %0 = vector.load %arg2[%c0, %c0_0, %c0_1, %c0_2] : memref<1x4x2x128xf32, #tpu.memory_space<vmem>>, vector<1x1x2x128xf32>
    %1 = vector.shape_cast %0 : vector<1x1x2x128xf32> to vector<2x128xf32>
    %c0_3 = arith.constant 0 : index
    %2 = memref.load %arg3[%c0_3] : memref<4xf32, #tpu.memory_space<smem>>
    %3 = vector.broadcast %2 : f32 to vector<2x128xf32>
    %4 = arith.mulf %1, %3 : vector<2x128xf32>
    %c0_4 = arith.constant 0 : index
    %c1 = arith.constant 1 : index
    %c0_5 = arith.constant 0 : index
    %c0_6 = arith.constant 0 : index
    %5 = vector.load %arg2[%c0_4, %c1, %c0_5, %c0_6] : memref<1x4x2x128xf32, #tpu.memory_space<vmem>>, vector<1x1x2x128xf32>
    %6 = vector.shape_cast %5 : vector<1x1x2x128xf32> to vector<2x128xf32>
    %c1_7 = arith.constant 1 : index
    %7 = memref.load %arg3[%c1_7] : memref<4xf32, #tpu.memory_space<smem>>
    %8 = vector.broadcast %7 : f32 to vector<2x128xf32>
    %9 = arith.mulf %6, %8 : vector<2x128xf32>
    %10 = arith.addf %4, %9 : vector<2x128xf32>
    %c0_8 = arith.constant 0 : index
    %c2 = arith.constant 2 : index
    %c0_9 = arith.constant 0 : index
    %c0_10 = arith.constant 0 : index
    %11 = vector.load %arg2[%c0_8, %c2, %c0_9, %c0_10] : memref<1x4x2x128xf32, #tpu.memory_space<vmem>>, vector<1x1x2x128xf32>
    %12 = vector.shape_cast %11 : vector<1x1x2x128xf32> to vector<2x128xf32>
    %c2_11 = arith.constant 2 : index
    %13 = memref.load %arg3[%c2_11] : memref<4xf32, #tpu.memory_space<smem>>
    %14 = vector.broadcast %13 : f32 to vector<2x128xf32>
    %15 = arith.mulf %12, %14 : vector<2x128xf32>
    %16 = arith.addf %10, %15 : vector<2x128xf32>
    %c0_12 = arith.constant 0 : index
    %c3 = arith.constant 3 : index
    %c0_13 = arith.constant 0 : index
    %c0_14 = arith.constant 0 : index
    %17 = vector.load %arg2[%c0_12, %c3, %c0_13, %c0_14] : memref<1x4x2x128xf32, #tpu.memory_space<vmem>>, vector<1x1x2x128xf32>
    %18 = vector.shape_cast %17 : vector<1x1x2x128xf32> to vector<2x128xf32>
    %c3_15 = arith.constant 3 : index
    %19 = memref.load %arg3[%c3_15] : memref<4xf32, #tpu.memory_space<smem>>
    %20 = vector.broadcast %19 : f32 to vector<2x128xf32>
    %21 = arith.mulf %18, %20 : vector<2x128xf32>
    %22 = arith.addf %16, %21 : vector<2x128xf32>
    %c0_16 = arith.constant 0 : index
    %23 = memref.load %arg4[%c0_16] : memref<1xf32, #tpu.memory_space<smem>>
    %24 = vector.broadcast %23 : f32 to vector<2x128xf32>
    %25 = arith.addf %22, %24 : vector<2x128xf32>
    %cst = arith.constant 0.000000e+00 : f32
    %26 = vector.broadcast %cst : f32 to vector<2x128xf32>
    %27 = arith.subf %26, %25 : vector<2x128xf32>
    %28 = math.exp %27 : vector<2x128xf32>
    %cst_17 = arith.constant 1.000000e+00 : f32
    %29 = vector.broadcast %cst_17 : f32 to vector<2x128xf32>
    %30 = arith.addf %29, %28 : vector<2x128xf32>
    %31 = tpu.reciprocal %30 : vector<2x128xf32> -> vector<2x128xf32>
    %c0_18 = arith.constant 0 : index
    %c0_19 = arith.constant 0 : index
    %c0_20 = arith.constant 0 : index
    %32 = vector.load %arg5[%c0_18, %c0_19, %c0_20] : memref<1x2x128xf32, #tpu.memory_space<vmem>>, vector<1x2x128xf32>
    %33 = vector.shape_cast %32 : vector<1x2x128xf32> to vector<2x128xf32>
    %34 = vector.shape_cast %31 : vector<2x128xf32> to vector<1x2x128xf32>
    tpu.vector_store %arg5[%c0_18, %c0_19, %c0_20], %34 {strides = array<i32>} : memref<1x2x128xf32, #tpu.memory_space<vmem>>, vector<1x2x128xf32>,
    %cst_21 = arith.constant dense<0.000000e+00> : vector<128xf32>
    %35 = vector.multi_reduction <add>, %31, %cst_21 [0] : vector<2x128xf32> to vector<128xf32>
    %36 = vector.shape_cast %35 : vector<128xf32> to vector<1x128xf32>
    %c0_22 = arith.constant 0 : index
    %c0_23 = arith.constant 0 : index
    %c0_24 = arith.constant 0 : index
    %c0_25 = arith.constant 0 : index
    %37 = vector.load %arg6[%c0_22, %c0_23, %c0_24, %c0_25] : memref<1x1x1x128xf32, #tpu.memory_space<vmem>>, vector<1x1x1x128xf32>
    %38 = vector.shape_cast %37 : vector<1x1x1x128xf32> to vector<1x128xf32>
    %39 = vector.shape_cast %36 : vector<1x128xf32> to vector<1x1x1x128xf32>
    tpu.vector_store %arg6[%c0_22, %c0_23, %c0_24, %c0_25], %39 {strides = array<i32>} : memref<1x1x1x128xf32, #tpu.memory_space<vmem>>, vector<1x1x1x128xf32>,
    return
  }
  func.func @transform_0(%arg0: i32, %arg1: i32) -> (i32, i32, i32, i32) {
    %c0_i32 = arith.constant 0 : i32
    %c0_i32_0 = arith.constant 0 : i32
    %c0_i32_1 = arith.constant 0 : i32
    return %arg0, %c0_i32, %arg1, %c0_i32_0 : i32, i32, i32, i32
  }
  func.func @transform_1(%arg0: i32, %arg1: i32) -> i32 {
    %c0_i32 = arith.constant 0 : i32
    %c0_i32_0 = arith.constant 0 : i32
    return %c0_i32 : i32
  }
  func.func @transform_2(%arg0: i32, %arg1: i32) -> i32 {
    %c0_i32 = arith.constant 0 : i32
    %c0_i32_0 = arith.constant 0 : i32
    return %c0_i32 : i32
  }
  func.func @transform_3(%arg0: i32, %arg1: i32) -> (i32, i32, i32) {
    %c0_i32 = arith.constant 0 : i32
    %c0_i32_0 = arith.constant 0 : i32
    return %arg0, %arg1, %c0_i32 : i32, i32, i32
  }
  func.func @transform_4(%arg0: i32, %arg1: i32) -> (i32, i32, i32, i32) {
    %c0_i32 = arith.constant 0 : i32
    %c0_i32_0 = arith.constant 0 : i32
    %c0_i32_1 = arith.constant 0 : i32
    return %arg0, %arg1, %c0_i32, %c0_i32_0 : i32, i32, i32, i32
  }
}

</mosaic_0001>

<llo_original>
// kernel: attention_mask_forward.3
$region0: #{attention_mask_forward.3}
  #allocation0 [shape = 'u32[]', space=smem, size = 0x4, offset = 0x4, fixed_abs, tag = 'smem constant byte address 0x4 - core index']
  #allocation1 [shape = 'u32[144,128]{1,0:T(1,128)}', space=vmem, size = 0x12000, scoped, tag = 'internal scratch']
  #allocation2 [shape = 'f32[1]{0:T(128)S(6)}', space=smem, size = 0x200, scoped, tag = 'scoped memory for attention_mask_forward.3']
  %s0 = inlined_call_operand.vmem [shape: f32[2,2,128], index: 0, kind: input, shape index: {}, may-alias: {0,2}]
  %s1 = inlined_call_operand.<no memory space> [shape: f32[1], index: 1, kind: input, shape index: {}]
  %s2 = inlined_call_operand.vmem [shape: f32[2,2,128], index: 2, kind: output, shape index: {}, may-alias: {0,2}]
  %s3 = sld [smem:[#allocation0]]
  $region41: #{attention_mask_forward.3} parent=0
    _
  %s5 = ssub.s32 1, %s3
  %s6 = scalar_select 0, %s5, %s3
  %7 = sst [smem:[#allocation2]] %s1
  loop: start=0, step=1, limit=4
  $region2: #{attention_mask_forward.3} parent=0 // loop_pre_header
    _
  $region3: #{attention_mask_forward.3} parent=0 // loop_header
    %s9 = sphi 0, %s13
    %p10 = scmp.ge.s32.totalorder %s9, 4
    %s16 = sphi 0, %s28
    %s17 = sphi 0, %s24
    %s18 = sphi 0, %s16
    %s19 = sphi 0, %s17
    %s20 = sphi 0, %s18
    %s21 = sphi 0, %s19
    %s33 = sphi 0, %s35
    %s36 = sphi 0, %s33
    %s37 = sphi 0, %s36
    %s53 = sphi 0, %s37
    %s57 = sphi 0, %s57
    %s59 = sphi 0, %s57
    %s60 = sphi 0, %s59
    %s74 = sphi 0, %s60
    %s82 = sphi 0, %s84
    %s85 = sphi 0, %s82
    %s86 = sphi 0, %s85
    %s102 = sphi 0, %s86
  $region4: #{attention_mask_forward.3} parent=0 // loop_header_branch
    %12 = sbr.rel (%p10) target = $region8
  $region5: #{attention_mask_forward.3} parent=0 // loop_body
    %s14 = ssub.s32 %s9, 1
    %s15 = ssub.s32 %s9, 2
    %s22 = sadd.s32 1, %s17
    %p23 = scmp.ge.s32.totalorder %s22, 1
    %s24 = scalar_select %p23, 0, %s22
    %s25 = sadd.s32 1, %s16
    %s26 = scalar_select %p23, %s25, %s16
    %p27 = scmp.ge.s32.totalorder %s26, 2
    %s28 = scalar_select %p27, 0, %s26
    %s29 = ssub.s32 %s16, %s28
    %s30 = ssub.s32 %s17, %s24
    %s31 = sor.u32 %s29, %s30
    %p32 = scmp.eq.s32.totalorder %s31, 0
    %s34 = sadd.s32 %s33, 1
    %s35 = scalar_select %p32, %s33, %s34
    %p38 = pneg %p32
    %p39 = scmp.eq.s32.totalorder %s9, 1
    %p40 = por %p38, %p39
    %p41 = scmp.ne.s32.totalorder %s33, %s36
    %p42 = scmp.eq.s32.totalorder %s9, 0
    %p43 = por %p41, %p42
    %p44 = scmp.ne.s32.totalorder %s33, %s36
    %p45 = scmp.eq.s32.totalorder %s14, 1
    %p46 = por %p44, %p45
    %p47 = scmp.ne.s32.totalorder %s36, %s37
    %p48 = scmp.eq.s32.totalorder %s14, 0
    %p49 = por %p47, %p48
    %p50 = scmp.ne.s32.totalorder %s36, %s37
    %p51 = scmp.eq.s32.totalorder %s15, 1
    %p52 = por %p50, %p51
    %p54 = scmp.ne.s32.totalorder %s37, %s53
    %p55 = scmp.eq.s32.totalorder %s15, 0
    %p56 = por %p54, %p55
    %s58 = sadd.s32 %s57, 1
    %p61 = scmp.eq.s32.totalorder %s9, 1
    %p62 = scmp.ne.s32.totalorder %s57, %s59
    %p63 = scmp.eq.s32.totalorder %s9, 0
    %p64 = por %p62, %p63
    %p65 = scmp.ne.s32.totalorder %s57, %s59
    %p66 = scmp.eq.s32.totalorder %s14, 1
    %p67 = por %p65, %p66
    %p68 = scmp.ne.s32.totalorder %s59, %s60
    %p69 = scmp.eq.s32.totalorder %s14, 0
    %p70 = por %p68, %p69
    %p71 = scmp.ne.s32.totalorder %s59, %s60
    %p72 = scmp.eq.s32.totalorder %s15, 1
    %p73 = por %p71, %p72
    %p75 = scmp.ne.s32.totalorder %s60, %s74
    %p76 = scmp.eq.s32.totalorder %s15, 0
    %p77 = por %p75, %p76
    %s78 = ssub.s32 %s16, %s28
    %s79 = ssub.s32 %s17, %s24
    %s80 = sor.u32 %s78, %s79
    %p81 = scmp.eq.s32.totalorder %s80, 0
    %s83 = sadd.s32 %s82, 1
    %s84 = scalar_select %p81, %s82, %s83
    %p87 = pneg %p81
    %p88 = scmp.eq.s32.totalorder %s9, 1
    %p89 = por %p87, %p88
    %p90 = scmp.ne.s32.totalorder %s82, %s85
    %p91 = scmp.eq.s32.totalorder %s9, 0
    %p92 = por %p90, %p91
    %p93 = scmp.ne.s32.totalorder %s82, %s85
    %p94 = scmp.eq.s32.totalorder %s14, 1
    %p95 = por %p93, %p94
    %p96 = scmp.ne.s32.totalorder %s85, %s86
    %p97 = scmp.eq.s32.totalorder %s14, 0
    %p98 = por %p96, %p97
    %p99 = scmp.ne.s32.totalorder %s85, %s86
    %p100 = scmp.eq.s32.totalorder %s15, 1
    %p101 = por %p99, %p100
    %p103 = scmp.ne.s32.totalorder %s86, %s102
    %p104 = scmp.eq.s32.totalorder %s15, 0
    %p105 = por %p103, %p104
    %p106 = scmp.le.s32.totalorder 1, %s9
    %p107 = scmp.lt.s32.totalorder %s9, 3
    %p108 = pnand %p106, %p107
    %p109 = pneg %p108
    // Predicated region
    $region9: #{attention_mask_forward.3} parent=5 // pred_check
      _
    $region10: #{attention_mask_forward.3} parent=5 // pred_check_branch
      %111 = sbr.rel (%p108) target = $region12
    $region11: #{attention_mask_forward.3} parent=5 // pred_region
      %s112 = ssub.s32 %s9, 1
      // Predicated region
      $region13: #{attention_mask_forward.3} parent=11 // pred_check
        %p113 = pneg %p70
      $region14: #{attention_mask_forward.3} parent=11 // pred_check_branch
        %115 = sbr.rel (%p113) target = $region16
      $region15: #{attention_mask_forward.3} parent=11 // pred_region
        _
      $region16: #{attention_mask_forward.3} parent=11 // pred_fallthru
        _
    $region12: #{attention_mask_forward.3} parent=5 // pred_fallthru
      _
    %p116 = scmp.lt.s32.totalorder %s9, 2
    // Predicated region
    $region17: #{attention_mask_forward.3} parent=5 // pred_check
      %p117 = pneg %p116
    $region18: #{attention_mask_forward.3} parent=5 // pred_check_branch
      %119 = sbr.rel (%p117) target = $region20
    $region19: #{attention_mask_forward.3} parent=5 // pred_region
      // Predicated region
      $region21: #{attention_mask_forward.3} parent=19 // pred_check
        %p120 = pneg %p43
      $region22: #{attention_mask_forward.3} parent=19 // pred_check_branch
        %122 = sbr.rel (%p120) target = $region24
      $region23: #{attention_mask_forward.3} parent=19 // pred_region
        %p123 = scmp.lt.s32.totalorder %s16, 1
        %s124 = scalar_select %p123, %s16, 1
        %p125 = scmp.lt.s32.totalorder %s17, 0
        %s126 = scalar_select %p125, %s17, 0
        %s127 = sadd.s32 %s126, %s124
        %s128 = smul.addr %s127, 2
        %s129 = scalar_lea.vmem %s0, %s128
      $region24: #{attention_mask_forward.3} parent=19 // pred_fallthru
        _
    $region20: #{attention_mask_forward.3} parent=5 // pred_fallthru
      _
    %p130 = scmp.le.s32.totalorder 1, %s9
    %p131 = scmp.lt.s32.totalorder %s9, 3
    %p132 = pnand %p130, %p131
    %p133 = pneg %p132
    // Predicated region
    $region25: #{attention_mask_forward.3} parent=5 // pred_check
      _
    $region26: #{attention_mask_forward.3} parent=5 // pred_check_branch
      %135 = sbr.rel (%p132) target = $region28
    $region27: #{attention_mask_forward.3} parent=5 // pred_region
      %s136 = ssub.s32 %s9, 1
      %p137 = scmp.lt.s32.totalorder %s18, 1
      %s138 = scalar_select %p137, %s18, 1
      %p139 = scmp.lt.s32.totalorder %s19, 0
      %s140 = scalar_select %p139, %s19, 0
      %s141 = sadd.s32 %s140, %s138
      %s142 = smul.addr %s141, 2
      %s143 = scalar_lea.vmem %s0, %s142
      %p144 = pneg %p49
      %p145 = pneg %p46
      %p146 = pneg %p70
      %p147 = pneg %p67
      %p148 = pneg %p98
      %p149 = pneg %p95
      %p150 = scmp.lt.s32.totalorder %s18, 1
      %s151 = scalar_select %p150, %s18, 1
      %p152 = scmp.lt.s32.totalorder %s19, 0
      %s153 = scalar_select %p152, %s19, 0
      %s154 = sadd.s32 %s153, %s151
      %s155 = smul.addr %s154, 2
      %s156 = scalar_lea.vmem %s2, %s155
      %p157 = scmp.lt.s32.totalorder %s18, 1
      %s158 = scalar_select %p157, %s18, 1
      %p159 = scmp.lt.s32.totalorder %s19, 0
      %s160 = scalar_select %p159, %s19, 0
      %s161 = sadd.s32 %s160, %s158
      %s162 = smul.addr %s161, 2
      %s163 = scalar_lea.vmem %s0, %s162
      %p164 = scmp.lt.s32.totalorder %s18, 1
      %s165 = scalar_select %p164, %s18, 1
      %p166 = scmp.lt.s32.totalorder %s19, 0
      %s167 = scalar_select %p166, %s19, 0
      %s168 = sadd.s32 %s167, %s165
      %s169 = smul.addr %s168, 2
      %s170 = scalar_lea.vmem %s2, %s169
      %v171 = vld [vmem:[%s163] sm:$0x3]
      %s172 = sld [smem:[#allocation2]]
      %v173 = vstv %s172
      %v174 = vmul.f32 %v171, %v173
      %175 = vst [vmem:[%s170] sm:$0x3] %v174
      %p176 = scmp.lt.s32.totalorder %s18, 1
      %s177 = scalar_select %p176, %s18, 1
      %p178 = scmp.lt.s32.totalorder %s19, 0
      %s179 = scalar_select %p178, %s19, 0
      %s180 = sadd.s32 %s179, %s177
      %s181 = smul.addr %s180, 2
      %s182 = scalar_lea.vmem %s2, %s181
      // Predicated region
      $region29: #{attention_mask_forward.3} parent=27 // pred_check
        %p183 = pneg %p95
      $region30: #{attention_mask_forward.3} parent=27 // pred_check_branch
        %185 = sbr.rel (%p183) target = $region32
      $region31: #{attention_mask_forward.3} parent=27 // pred_region
        _
      $region32: #{attention_mask_forward.3} parent=27 // pred_fallthru
        _
    $region28: #{attention_mask_forward.3} parent=5 // pred_fallthru
      _
    %p186 = scmp.le.s32.totalorder 2, %s9
    // Predicated region
    $region33: #{attention_mask_forward.3} parent=5 // pred_check
      %p187 = pneg %p186
    $region34: #{attention_mask_forward.3} parent=5 // pred_check_branch
      %189 = sbr.rel (%p187) target = $region36
    $region35: #{attention_mask_forward.3} parent=5 // pred_region
      %s190 = ssub.s32 %s9, 2
      // Predicated region
      $region37: #{attention_mask_forward.3} parent=35 // pred_check
        %p191 = pneg %p101
      $region38: #{attention_mask_forward.3} parent=35 // pred_check_branch
        %193 = sbr.rel (%p191) target = $region40
      $region39: #{attention_mask_forward.3} parent=35 // pred_region
        %p194 = scmp.lt.s32.totalorder %s20, 1
        %s195 = scalar_select %p194, %s20, 1
        %p196 = scmp.lt.s32.totalorder %s21, 0
        %s197 = scalar_select %p196, %s21, 0
        %s198 = sadd.s32 %s197, %s195
        %s199 = smul.addr %s198, 2
        %s200 = scalar_lea.vmem %s2, %s199
      $region40: #{attention_mask_forward.3} parent=35 // pred_fallthru
        _
    $region36: #{attention_mask_forward.3} parent=5 // pred_fallthru
      _
  $region6: #{attention_mask_forward.3} parent=0 // loop_footer
    %s13 = sadd.s32 1, %s9
  $region7: #{attention_mask_forward.3} parent=0 // loop_footer_branch
    %8 = sbr.rel target = $region3
  $region8: #{attention_mask_forward.3} parent=0 // loop_exit
    _

// kernel: attention_mask_forward.2
$region0: #{attention_mask_forward.2}
  #allocation0 [shape = 'u32[]', space=smem, size = 0x4, offset = 0x4, fixed_abs, tag = 'smem constant byte address 0x4 - core index']
  #allocation1 [shape = 'u32[144,128]{1,0:T(1,128)}', space=vmem, size = 0x12000, scoped, tag = 'internal scratch']
  #allocation2 [shape = 'f32[1]{0:T(128)S(6)}', space=smem, size = 0x200, scoped, tag = 'scoped memory for attention_mask_forward.2']
  %s0 = inlined_call_operand.vmem [shape: f32[2,4,2,128], index: 0, kind: input, shape index: {}]
  %s1 = inlined_call_operand.vmem [shape: f32[4], index: 1, kind: input, shape index: {}]
  %s2 = inlined_call_operand.<no memory space> [shape: f32[1], index: 2, kind: input, shape index: {}]
  %s3 = inlined_call_operand.vmem [shape: f32[2,2,128], index: 3, kind: output, shape index: {0}]
  %s4 = inlined_call_operand.vmem [shape: f32[2,1,1,128], index: 4, kind: output, shape index: {1}]
  %5 = xla_tuple %s3, %s4
  %s6 = sld [smem:[#allocation0]]
  $region57: #{attention_mask_forward.2} parent=0
    _
  %s8 = ssub.s32 1, %s6
  %s9 = scalar_select 0, %s8, %s6
  %10 = sst [smem:[#allocation2]] %s2
  $region1: #{attention_mask_forward.2} parent=0
    #allocation3 [shape = 'u8[512]{0}', space=smem, size = 0x200, scoped, tag = 'input window, operand 1, single buffered']
    #allocation4 [shape = 's32[2]{0}', space=sflag, size = 0x8, scoped, tag = 'scoped memory for attention_mask_forward.2']
    %11 = vsyncpa [#allocation4], 0
    loop: start=0, step=1, limit=4
    $region2: #{attention_mask_forward.2} parent=1 // loop_pre_header
      _
    $region3: #{attention_mask_forward.2} parent=1 // loop_header
      %s13 = sphi 0, %s17
      %p14 = scmp.ge.s32.totalorder %s13, 4
      %s20 = sphi 0, %s32
      %s21 = sphi 0, %s28
      %s22 = sphi 0, %s20
      %s23 = sphi 0, %s21
      %s24 = sphi 0, %s22
      %s25 = sphi 0, %s23
      %s37 = sphi 0, %s39
      %s40 = sphi 0, %s37
      %s41 = sphi 0, %s40
      %s57 = sphi 0, %s41
      %s61 = sphi 0, %s61
      %s63 = sphi 0, %s61
      %s64 = sphi 0, %s63
      %s78 = sphi 0, %s64
      %s82 = sphi 0, %s82
      %s84 = sphi 0, %s82
      %s85 = sphi 0, %s84
      %s99 = sphi 0, %s85
      %s107 = sphi 0, %s109
      %s110 = sphi 0, %s107
      %s111 = sphi 0, %s110
      %s127 = sphi 0, %s111
      %s135 = sphi 0, %s137
      %s138 = sphi 0, %s135
      %s139 = sphi 0, %s138
      %s155 = sphi 0, %s139
    $region4: #{attention_mask_forward.2} parent=1 // loop_header_branch
      %16 = sbr.rel (%p14) target = $region8
    $region5: #{attention_mask_forward.2} parent=1 // loop_body
      %s18 = ssub.s32 %s13, 1
      %s19 = ssub.s32 %s13, 2
      %s26 = sadd.s32 1, %s21
      %p27 = scmp.ge.s32.totalorder %s26, 1
      %s28 = scalar_select %p27, 0, %s26
      %s29 = sadd.s32 1, %s20
      %s30 = scalar_select %p27, %s29, %s20
      %p31 = scmp.ge.s32.totalorder %s30, 2
      %s32 = scalar_select %p31, 0, %s30
      %s33 = ssub.s32 %s20, %s32
      %s34 = ssub.s32 %s21, %s28
      %s35 = sor.u32 %s33, %s34
      %p36 = scmp.eq.s32.totalorder %s35, 0
      %s38 = sadd.s32 %s37, 1
      %s39 = scalar_select %p36, %s37, %s38
      %p42 = pneg %p36
      %p43 = scmp.eq.s32.totalorder %s13, 1
      %p44 = por %p42, %p43
      %p45 = scmp.ne.s32.totalorder %s37, %s40
      %p46 = scmp.eq.s32.totalorder %s13, 0
      %p47 = por %p45, %p46
      %p48 = scmp.ne.s32.totalorder %s37, %s40
      %p49 = scmp.eq.s32.totalorder %s18, 1
      %p50 = por %p48, %p49
      %p51 = scmp.ne.s32.totalorder %s40, %s41
      %p52 = scmp.eq.s32.totalorder %s18, 0
      %p53 = por %p51, %p52
      %p54 = scmp.ne.s32.totalorder %s40, %s41
      %p55 = scmp.eq.s32.totalorder %s19, 1
      %p56 = por %p54, %p55
      %p58 = scmp.ne.s32.totalorder %s41, %s57
      %p59 = scmp.eq.s32.totalorder %s19, 0
      %p60 = por %p58, %p59
      %s62 = sadd.s32 %s61, 1
      %p65 = scmp.eq.s32.totalorder %s13, 1
      %p66 = scmp.ne.s32.totalorder %s61, %s63
      %p67 = scmp.eq.s32.totalorder %s13, 0
      %p68 = por %p66, %p67
      %p69 = scmp.ne.s32.totalorder %s61, %s63
      %p70 = scmp.eq.s32.totalorder %s18, 1
      %p71 = por %p69, %p70
      %p72 = scmp.ne.s32.totalorder %s63, %s64
      %p73 = scmp.eq.s32.totalorder %s18, 0
      %p74 = por %p72, %p73
      %p75 = scmp.ne.s32.totalorder %s63, %s64
      %p76 = scmp.eq.s32.totalorder %s19, 1
      %p77 = por %p75, %p76
      %p79 = scmp.ne.s32.totalorder %s64, %s78
      %p80 = scmp.eq.s32.totalorder %s19, 0
      %p81 = por %p79, %p80
      %s83 = sadd.s32 %s82, 1
      %p86 = scmp.eq.s32.totalorder %s13, 1
      %p87 = scmp.ne.s32.totalorder %s82, %s84
      %p88 = scmp.eq.s32.totalorder %s13, 0
      %p89 = por %p87, %p88
      %p90 = scmp.ne.s32.totalorder %s82, %s84
      %p91 = scmp.eq.s32.totalorder %s18, 1
      %p92 = por %p90, %p91
      %p93 = scmp.ne.s32.totalorder %s84, %s85
      %p94 = scmp.eq.s32.totalorder %s18, 0
      %p95 = por %p93, %p94
      %p96 = scmp.ne.s32.totalorder %s84, %s85
      %p97 = scmp.eq.s32.totalorder %s19, 1
      %p98 = por %p96, %p97
      %p100 = scmp.ne.s32.totalorder %s85, %s99
      %p101 = scmp.eq.s32.totalorder %s19, 0
      %p102 = por %p100, %p101
      %s103 = ssub.s32 %s20, %s32
      %s104 = ssub.s32 %s21, %s28
      %s105 = sor.u32 %s103, %s104
      %p106 = scmp.eq.s32.totalorder %s105, 0
      %s108 = sadd.s32 %s107, 1
      %s109 = scalar_select %p106, %s107, %s108
      %p112 = pneg %p106
      %p113 = scmp.eq.s32.totalorder %s13, 1
      %p114 = por %p112, %p113
      %p115 = scmp.ne.s32.totalorder %s107, %s110
      %p116 = scmp.eq.s32.totalorder %s13, 0
      %p117 = por %p115, %p116
      %p118 = scmp.ne.s32.totalorder %s107, %s110
      %p119 = scmp.eq.s32.totalorder %s18, 1
      %p120 = por %p118, %p119
      %p121 = scmp.ne.s32.totalorder %s110, %s111
      %p122 = scmp.eq.s32.totalorder %s18, 0
      %p123 = por %p121, %p122
      %p124 = scmp.ne.s32.totalorder %s110, %s111
      %p125 = scmp.eq.s32.totalorder %s19, 1
      %p126 = por %p124, %p125
      %p128 = scmp.ne.s32.totalorder %s111, %s127
      %p129 = scmp.eq.s32.totalorder %s19, 0
      %p130 = por %p128, %p129
      %s131 = ssub.s32 %s20, %s32
      %s132 = ssub.s32 %s21, %s28
      %s133 = sor.u32 %s131, %s132
      %p134 = scmp.eq.s32.totalorder %s133, 0
      %s136 = sadd.s32 %s135, 1
      %s137 = scalar_select %p134, %s135, %s136
      %p140 = pneg %p134
      %p141 = scmp.eq.s32.totalorder %s13, 1
      %p142 = por %p140, %p141
      %p143 = scmp.ne.s32.totalorder %s135, %s138
      %p144 = scmp.eq.s32.totalorder %s13, 0
      %p145 = por %p143, %p144
      %p146 = scmp.ne.s32.totalorder %s135, %s138
      %p147 = scmp.eq.s32.totalorder %s18, 1
      %p148 = por %p146, %p147
      %p149 = scmp.ne.s32.totalorder %s138, %s139
      %p150 = scmp.eq.s32.totalorder %s18, 0
      %p151 = por %p149, %p150
      %p152 = scmp.ne.s32.totalorder %s138, %s139
      %p153 = scmp.eq.s32.totalorder %s19, 1
      %p154 = por %p152, %p153
      %p156 = scmp.ne.s32.totalorder %s139, %s155
      %p157 = scmp.eq.s32.totalorder %s19, 0
      %p158 = por %p156, %p157
      %p159 = scmp.le.s32.totalorder 1, %s13
      %p160 = scmp.lt.s32.totalorder %s13, 3
      %p161 = pnand %p159, %p160
      %p162 = pneg %p161
      // Predicated region
      $region9: #{attention_mask_forward.2} parent=5 // pred_check
        _
      $region10: #{attention_mask_forward.2} parent=5 // pred_check_branch
        %164 = sbr.rel (%p161) target = $region12
      $region11: #{attention_mask_forward.2} parent=5 // pred_region
        %s165 = ssub.s32 %s13, 1
        // Predicated region
        $region13: #{attention_mask_forward.2} parent=11 // pred_check
          %p166 = pneg %p74
        $region14: #{attention_mask_forward.2} parent=11 // pred_check_branch
          %168 = sbr.rel (%p166) target = $region16
        $region15: #{attention_mask_forward.2} parent=11 // pred_region
          %s170 = ssub.s32 16, 16
          %171 = vsyncadd [#allocation4], %s170
          %s173 = sshll.u32 %s1, 4
          %s174 = int_to_ptr.vmem [resolvable:$true] %s173
          %176 = dma.vmem_to_smem %s174, 16, [#allocation3], [#allocation4]
        $region16: #{attention_mask_forward.2} parent=11 // pred_fallthru
          _
        // Predicated region
        $region17: #{attention_mask_forward.2} parent=11 // pred_check
          %p177 = pneg %p95
        $region18: #{attention_mask_forward.2} parent=11 // pred_check_branch
          %179 = sbr.rel (%p177) target = $region20
        $region19: #{attention_mask_forward.2} parent=11 // pred_region
          _
        $region20: #{attention_mask_forward.2} parent=11 // pred_fallthru
          _
      $region12: #{attention_mask_forward.2} parent=5 // pred_fallthru
        _
      %p180 = scmp.lt.s32.totalorder %s13, 2
      // Predicated region
      $region21: #{attention_mask_forward.2} parent=5 // pred_check
        %p181 = pneg %p180
      $region22: #{attention_mask_forward.2} parent=5 // pred_check_branch
        %183 = sbr.rel (%p181) target = $region24
      $region23: #{attention_mask_forward.2} parent=5 // pred_region
        // Predicated region
        $region25: #{attention_mask_forward.2} parent=23 // pred_check
          %p184 = pneg %p47
        $region26: #{attention_mask_forward.2} parent=23 // pred_check_branch
          %186 = sbr.rel (%p184) target = $region28
        $region27: #{attention_mask_forward.2} parent=23 // pred_region
          %p187 = scmp.lt.s32.totalorder %s20, 1
          %s188 = scalar_select %p187, %s20, 1
          %p189 = scmp.lt.s32.totalorder %s21, 0
          %s190 = scalar_select %p189, %s21, 0
          %s191 = smul.addr %s188, 4
          %s192 = sadd.s32 %s190, %s191
          %s193 = smul.addr %s192, 2
          %s194 = scalar_lea.vmem %s0, %s193
        $region28: #{attention_mask_forward.2} parent=23 // pred_fallthru
          _
      $region24: #{attention_mask_forward.2} parent=5 // pred_fallthru
        _
      %p195 = scmp.le.s32.totalorder 1, %s13
      %p196 = scmp.lt.s32.totalorder %s13, 3
      %p197 = pnand %p195, %p196
      %p198 = pneg %p197
      // Predicated region
      $region29: #{attention_mask_forward.2} parent=5 // pred_check
        _
      $region30: #{attention_mask_forward.2} parent=5 // pred_check_branch
        %200 = sbr.rel (%p197) target = $region32
      $region31: #{attention_mask_forward.2} parent=5 // pred_region
        %s201 = ssub.s32 %s13, 1
        // Predicated region
        $region33: #{attention_mask_forward.2} parent=31 // pred_check
          %p202 = pneg %p74
        $region34: #{attention_mask_forward.2} parent=31 // pred_check_branch
          %204 = sbr.rel (%p202) target = $region36
        $region35: #{attention_mask_forward.2} parent=31 // pred_region
          %205 = dma.done [#allocation4], 16
        $region36: #{attention_mask_forward.2} parent=31 // pred_fallthru
          _
        %206 = sfence
        %p207 = scmp.lt.s32.totalorder %s22, 1
        %s208 = scalar_select %p207, %s22, 1
        %p209 = scmp.lt.s32.totalorder %s23, 0
        %s210 = scalar_select %p209, %s23, 0
        %s211 = smul.addr %s208, 4
        %s212 = sadd.s32 %s210, %s211
        %s213 = smul.addr %s212, 2
        %s214 = scalar_lea.vmem %s0, %s213
        %p215 = pneg %p53
        %p216 = pneg %p50
        %p217 = pneg %p74
        %p218 = pneg %p71
        %p219 = pneg %p95
        %p220 = pneg %p92
        %p221 = pneg %p123
        %p222 = pneg %p120
        %p223 = scmp.lt.s32.totalorder %s22, 1
        %s224 = scalar_select %p223, %s22, 1
        %p225 = scmp.lt.s32.totalorder %s23, 0
        %s226 = scalar_select %p225, %s23, 0
        %s227 = sadd.s32 %s226, %s224
        %s228 = smul.addr %s227, 2
        %s229 = scalar_lea.vmem %s3, %s228
        %p230 = pneg %p151
        %p231 = pneg %p148
        %p232 = scmp.lt.s32.totalorder %s22, 1
        %s233 = scalar_select %p232, %s22, 1
        %p234 = scmp.lt.s32.totalorder %s23, 0
        %s235 = scalar_select %p234, %s23, 0
        %s236 = sadd.s32 %s235, %s233
        %s237 = scalar_lea.vmem %s4, %s236
        %p238 = scmp.lt.s32.totalorder %s22, 1
        %s239 = scalar_select %p238, %s22, 1
        %p240 = scmp.lt.s32.totalorder %s23, 0
        %s241 = scalar_select %p240, %s23, 0
        %s242 = smul.addr %s239, 4
        %s243 = sadd.s32 %s241, %s242
        %s244 = smul.addr %s243, 2
        %s245 = scalar_lea.vmem %s0, %s244
        %p246 = scmp.lt.s32.totalorder %s22, 1
        %s247 = scalar_select %p246, %s22, 1
        %p248 = scmp.lt.s32.totalorder %s23, 0
        %s249 = scalar_select %p248, %s23, 0
        %s250 = sadd.s32 %s249, %s247
        %s251 = smul.addr %s250, 2
        %s252 = scalar_lea.vmem %s3, %s251
        %p253 = scmp.lt.s32.totalorder %s22, 1
        %s254 = scalar_select %p253, %s22, 1
        %p255 = scmp.lt.s32.totalorder %s23, 0
        %s256 = scalar_select %p255, %s23, 0
        %s257 = sadd.s32 %s256, %s254
        %s258 = scalar_lea.vmem %s4, %s257
        %v259 = vld [vmem:[%s245] sm:$0x3]
        %s260 = sld [smem:[#allocation3]]
        %v261 = vstv %s260
        %v262 = vmul.f32 %v259, %v261
        %s263 = scalar_lea.vmem %s245, 2
        %v264 = vld [vmem:[%s263] sm:$0x3]
        %s265 = sld [smem:[#allocation3 + $0x1]]
        %v266 = vstv %s265
        %v267 = vmul.f32 %v264, %v266
        %v268 = vadd.f32 %v262, %v267
        %s269 = scalar_lea.vmem %s245, 4
        %v270 = vld [vmem:[%s269] sm:$0x3]
        %s271 = sld [smem:[#allocation3 + $0x2]]
        %v272 = vstv %s271
        %v273 = vmul.f32 %v270, %v272
        %v274 = vadd.f32 %v268, %v273
        %s275 = scalar_lea.vmem %s245, 6
        %v276 = vld [vmem:[%s275] sm:$0x3]
        %s277 = sld [smem:[#allocation3 + $0x3]]
        %v278 = vstv %s277
        %v279 = vmul.f32 %v276, %v278
        %v280 = vadd.f32 %v274, %v279
        %s281 = sld [smem:[#allocation2]]
        %v282 = vstv %s281
        %v283 = vadd.f32 %v280, %v282
        %v284 = vsub.f32 0.0, %v283
        %v285 = vmul.f32 %v284, 1.442695
        %v286 = vpow.pop %v285
        %v287 = vadd.f32 %v286, 1.0
        %v288 = vrcp.pop %v287
        %289 = vst [vmem:[%s252] sm:$0x3] %v288
        %vm290 = vcmask 1041408
        %v291 = vsel %vm290, %v288, 0.0
        %v292 = vrot.slane %v291, 4
        %v293 = vadd.f32 %v291, %v292
        %v294 = vrot.slane %v293, 2
        %v295 = vadd.f32 %v293, %v294
        %v296 = vrot.slane %v295, 1
        %v297 = vadd.f32 %v295, %v296
        %298 = vst [vmem:[%s258] sm:$0x1] %v297
        %p299 = scmp.lt.s32.totalorder %s22, 1
        %s300 = scalar_select %p299, %s22, 1
        %p301 = scmp.lt.s32.totalorder %s23, 0
        %s302 = scalar_select %p301, %s23, 0
        %s303 = sadd.s32 %s302, %s300
        %s304 = smul.addr %s303, 2
        %s305 = scalar_lea.vmem %s3, %s304
        %p306 = scmp.lt.s32.totalorder %s22, 1
        %s307 = scalar_select %p306, %s22, 1
        %p308 = scmp.lt.s32.totalorder %s23, 0
        %s309 = scalar_select %p308, %s23, 0
        %s310 = sadd.s32 %s309, %s307
        %s311 = scalar_lea.vmem %s4, %s310
        // Predicated region
        $region37: #{attention_mask_forward.2} parent=31 // pred_check
          %p312 = pneg %p120
        $region38: #{attention_mask_forward.2} parent=31 // pred_check_branch
          %314 = sbr.rel (%p312) target = $region40
        $region39: #{attention_mask_forward.2} parent=31 // pred_region
          _
        $region40: #{attention_mask_forward.2} parent=31 // pred_fallthru
          _
        // Predicated region
        $region41: #{attention_mask_forward.2} parent=31 // pred_check
          %p315 = pneg %p148
        $region42: #{attention_mask_forward.2} parent=31 // pred_check_branch
          %317 = sbr.rel (%p315) target = $region44
        $region43: #{attention_mask_forward.2} parent=31 // pred_region
          _
        $region44: #{attention_mask_forward.2} parent=31 // pred_fallthru
          _
      $region32: #{attention_mask_forward.2} parent=5 // pred_fallthru
        _
      %p318 = scmp.le.s32.totalorder 2, %s13
      // Predicated region
      $region45: #{attention_mask_forward.2} parent=5 // pred_check
        %p319 = pneg %p318
      $region46: #{attention_mask_forward.2} parent=5 // pred_check_branch
        %321 = sbr.rel (%p319) target = $region48
      $region47: #{attention_mask_forward.2} parent=5 // pred_region
        %s322 = ssub.s32 %s13, 2
        // Predicated region
        $region49: #{attention_mask_forward.2} parent=47 // pred_check
          %p323 = pneg %p126
        $region50: #{attention_mask_forward.2} parent=47 // pred_check_branch
          %325 = sbr.rel (%p323) target = $region52
        $region51: #{attention_mask_forward.2} parent=47 // pred_region
          %p326 = scmp.lt.s32.totalorder %s24, 1
          %s327 = scalar_select %p326, %s24, 1
          %p328 = scmp.lt.s32.totalorder %s25, 0
          %s329 = scalar_select %p328, %s25, 0
          %s330 = sadd.s32 %s329, %s327
          %s331 = smul.addr %s330, 2
          %s332 = scalar_lea.vmem %s3, %s331
        $region52: #{attention_mask_forward.2} parent=47 // pred_fallthru
          _
        // Predicated region
        $region53: #{attention_mask_forward.2} parent=47 // pred_check
          %p333 = pneg %p154
        $region54: #{attention_mask_forward.2} parent=47 // pred_check_branch
          %335 = sbr.rel (%p333) target = $region56
        $region55: #{attention_mask_forward.2} parent=47 // pred_region
          %p336 = scmp.lt.s32.totalorder %s24, 1
          %s337 = scalar_select %p336, %s24, 1
          %p338 = scmp.lt.s32.totalorder %s25, 0
          %s339 = scalar_select %p338, %s25, 0
          %s340 = sadd.s32 %s339, %s337
          %s341 = scalar_lea.vmem %s4, %s340
        $region56: #{attention_mask_forward.2} parent=47 // pred_fallthru
          _
      $region48: #{attention_mask_forward.2} parent=5 // pred_fallthru
        _
    $region6: #{attention_mask_forward.2} parent=1 // loop_footer
      %s17 = sadd.s32 1, %s13
    $region7: #{attention_mask_forward.2} parent=1 // loop_footer_branch
      %12 = sbr.rel target = $region3
    $region8: #{attention_mask_forward.2} parent=1 // loop_exit
      _
    %342 = vsyncpa [#allocation4], 1
    %s343 = scalar_lea.sflag [#allocation4], 1
    %344 = vsyncpa %s343, 1

</llo_original>
